<compile_context>
chip_gen: v6e
topology: v6e:2x2x1
jax: 0.10.0
libtpu: 0.0.40
codegen_flags: <defaults>
</compile_context>

<pallas_src>
import functools

import jax
import jax.numpy as jnp
from jax import lax
from jax.experimental import pallas as pl
from jax.experimental.pallas import tpu as pltpu

BN_EPS = 1e-5


# --------------------------------------------------------------------------- kernel

def mlp_block_kernel(x_ref, w1_ref, b1_ref, g_ref, beta_ref, w2_ref, b2_ref,
                     o_ref, acc_ref, xc_ref, *, compute_dtype):
    h_idx = pl.program_id(0)

    @pl.when(h_idx == 0)
    def _init():
        acc_ref[...] = jnp.zeros_like(acc_ref)
        # Hoisted once-per-call cast of x to the MXU dtype (reused every grid step).
        xc_ref[...] = x_ref[...].astype(compute_dtype)

    # ---- l1: h = x @ w1_tile^T + b1_tile (MXU; w1 tile in native (TH, D_in)) ----
    w1 = w1_ref[...]
    if w1.dtype != compute_dtype:          # no-op when bf16 weights are streamed
        w1 = w1.astype(compute_dtype)
    h = lax.dot_general(
        xc_ref[...], w1,
        dimension_numbers=(((1,), (1,)), ((), ())),     # contract last dims (NT)
        preferred_element_type=jnp.float32,
    )
    h = h + b1_ref[...]                                 # (B, TH) f32

    # ---- BatchNorm1d, training-mode batch statistics (exact: full batch resident).
    # Centered two-pass variance (PyTorch-style, no cancellation), fused affine FMA.
    inv_b = 1.0 / h.shape[0]
    mean = jnp.sum(h, axis=0, keepdims=True) * inv_b
    d = h - mean
    var = jnp.sum(d * d, axis=0, keepdims=True) * inv_b          # biased variance
    scale = g_ref[...] * lax.rsqrt(var + BN_EPS)                  # (1, TH), rsqrt -> EUP
    a = jnp.maximum(d * scale + beta_ref[...], 0.0)               # BN affine + ReLU

    # ---- l2 partial: acc += a @ w2t_tile  (w2t tile is (TH, D_in), row-contiguous) ----
    w2 = w2_ref[...]
    if w2.dtype != compute_dtype:
        w2 = w2.astype(compute_dtype)
    acc_ref[...] += jnp.dot(a.astype(compute_dtype), w2,
                            preferred_element_type=jnp.float32)

    # ---- finalize: bias2 + residual, single lane-dense store ----
    @pl.when(h_idx == pl.num_programs(0) - 1)
    def _finalize():
        y = acc_ref[...] + b2_ref[...] + x_ref[...].astype(jnp.float32)
        o_ref[...] = y.astype(o_ref.dtype)


# --------------------------------------------------------------------------- helpers

def _vmem_capacity_bytes():
    """Physical VMEM per TensorCore; conservative fallback if the query is unavailable."""
    try:
        return int(pltpu.get_tpu_info().vmem_capacity_bytes)
    except Exception:
        return 64 << 20                     # v7x-safe fallback


def _preferred_block_multiple():
    """256 for 256-wide MXUs (v6e/v7x), 128 for v4/v5 generations."""
    try:
        kind = jax.devices()[0].device_kind.lower()
        if "v4" in kind or "v5" in kind:
            return 128
    except Exception:
        pass
    return 256


def _choose_block_h(H, D_in, w_itemsize, budget_bytes, nbuf, prefer):
    """Largest H-tile that divides H, is a multiple of `prefer` (fallback 128), and keeps
    the nbuf-buffered w1+w2t tiles within the weight VMEM budget. Falls back to full H."""
    per_row = 2 * nbuf * D_in * w_itemsize          # w1 tile + w2t tile, nbuf buffers each
    cap = max(1, budget_bytes // per_row)

    def largest(step):
        best = None
        if step and H % step == 0:
            th = step
            while th <= H:
                if H % th == 0 and th <= cap:
                    best = th
                th += step
        return best

    best = largest(prefer)
    if best is None:
        best = largest(128)
    if best is None:
        best = H                                    # tiny / unaligned H: single tile
    return best


def _spec(block_shape, index_map, buffers=None):
    """BlockSpec with optional explicit pipeline depth (falls back if unsupported)."""
    if buffers is None:
        return pl.BlockSpec(block_shape, index_map)
    try:
        return pl.BlockSpec(block_shape, index_map, pipeline_mode=pl.Buffered(buffers))
    except (TypeError, AttributeError):
        return pl.BlockSpec(block_shape, index_map)


def prepare_mlp_params(w1, b1, gamma, beta, w2, b2, *, weight_dtype=jnp.bfloat16):
    """One-time weight prep (do this where the weights persist, not per call):
       cast the big weights to the streaming dtype, pre-transpose w2 to (H, D_in) for
       row-contiguous tiles, reshape 1-D params to (1, dim) f32 lane rows."""
    H, D_in = w1.shape
    assert w2.shape == (D_in, H)
    return dict(
        w1=jnp.asarray(w1).astype(weight_dtype),                 # (H, D_in)
        w2t=jnp.asarray(w2).T.astype(weight_dtype),              # (H, D_in)
        b1=jnp.asarray(b1).reshape(1, H).astype(jnp.float32),
        gamma=jnp.asarray(gamma).reshape(1, H).astype(jnp.float32),
        beta=jnp.asarray(beta).reshape(1, H).astype(jnp.float32),
        b2=jnp.asarray(b2).reshape(1, D_in).astype(jnp.float32),
    )


# --------------------------------------------------------------------------- wrapper

def mlp_block(x, params, *, compute_dtype=jnp.bfloat16, block_h=None,
              weight_buffers=2, weight_vmem_budget_bytes=None):
    """x: (B, D_in). `params` from prepare_mlp_params (w1 (H,D_in), w2t (H,D_in), rows)."""
    B, D_in = x.shape
    w1, w2t = params["w1"], params["w2t"]
    H, d_chk = w1.shape
    assert d_chk == D_in and w2t.shape == (H, D_in)
    b1_r, g_r, beta_r, b2_r = params["b1"], params["gamma"], params["beta"], params["b2"]

    vmem_cap = _vmem_capacity_bytes()
    if weight_vmem_budget_bytes is None:
        # ~24 MiB on 128-MiB parts, ~16 MiB on v7x's 64 MiB.
        weight_vmem_budget_bytes = min(24 << 20, vmem_cap // 4)

    wsz = jnp.dtype(w1.dtype).itemsize
    if block_h is None:
        block_h = _choose_block_h(H, D_in, wsz, weight_vmem_budget_bytes,
                                  nbuf=weight_buffers,
                                  prefer=_preferred_block_multiple())
    assert H % block_h == 0, f"block_h={block_h} must divide H={H}"
    n_h = H // block_h

    xsz = jnp.dtype(x.dtype).itemsize
    csz = jnp.dtype(compute_dtype).itemsize
    # Rough VMEM need: single-buffered x/out, f32 accumulator, compute-dtype x copy,
    # nbuf-buffered weight tiles, padded per-feature rows.
    vmem_est = (B * D_in * (2 * xsz + 4 + csz)
                + 2 * weight_buffers * block_h * D_in * wsz
                + 6 * 8 * max(block_h, 128) * 4 + 8 * D_in * 4)
    vmem_limit = min(max(int(1.3 * vmem_est) + (2 << 20), 8 << 20),
                     int(0.78 * vmem_cap))               # generation-aware cap

    cost = pl.CostEstimate(
        flops=4 * B * H * D_in,                           # two matmuls
        transcendentals=H,                                # one rsqrt per feature
        bytes_accessed=(2 * B * D_in * xsz
                        + (w1.size + w2t.size) * wsz
                        + (3 * H + D_in) * 4),
    )

    grid_spec = pltpu.PrefetchScalarGridSpec(
        num_scalar_prefetch=0,
        grid=(n_h,),
        in_specs=[
            _spec((B, D_in), lambda h: (0, 0), buffers=1),                    # x (resident)
            _spec((block_h, D_in), lambda h: (h, 0), buffers=weight_buffers), # w1 tile
            _spec((1, block_h), lambda h: (0, h)),                            # b1 tile
            _spec((1, block_h), lambda h: (0, h)),                            # gamma tile
            _spec((1, block_h), lambda h: (0, h)),                            # beta tile
            _spec((block_h, D_in), lambda h: (h, 0), buffers=weight_buffers), # w2t tile
            _spec((1, D_in), lambda h: (0, 0), buffers=1),                    # b2 (resident)
        ],
        out_specs=_spec((B, D_in), lambda h: (0, 0), buffers=1),              # resident
        scratch_shapes=[pltpu.VMEM((B, D_in), jnp.float32),                   # f32 acc
                        pltpu.VMEM((B, D_in), compute_dtype)],                # x in MXU dtype
    )

    return pl.pallas_call(
        functools.partial(mlp_block_kernel, compute_dtype=compute_dtype),
        out_shape=jax.ShapeDtypeStruct((B, D_in), x.dtype),
        grid_spec=grid_spec,
        compiler_params=pltpu.CompilerParams(
            dimension_semantics=("arbitrary",),           # H is a reduction axis
            vmem_limit_bytes=vmem_limit,
        ),
        cost_estimate=cost,
    )(x, w1, b1_r, g_r, beta_r, w2t, b2_r)


# --------------------------------------------------------------------------- reference

def mlp_block_ref(x, w1, b1, gamma, beta, w2, b2):
    """Pure-JAX reference mirroring PyTorch training-mode forward (f32)."""
    h = x @ w1.T + b1
    mean = jnp.mean(h, axis=0, keepdims=True)
    var = jnp.mean((h - mean) ** 2, axis=0, keepdims=True)       # biased variance
    h = (h - mean) / jnp.sqrt(var + BN_EPS)
    h = h * gamma + beta
    h = jnp.maximum(h, 0.0)
    y = h @ w2.T + b2
    return x + y


def _rel_l2(a, b):
    a = a.astype(jnp.float32)
    b = b.astype(jnp.float32)
    return float(jnp.linalg.norm(a - b) / (jnp.linalg.norm(b) + 1e-12))


# --------------------------------------------------------------------------- demo

if __name__ == "__main__":
    # Lane/MXU-aligned small shapes so the output store is an unmasked lane-dense vst.
    batch, input_dim, hidden_dim = 128, 128, 256

    key = jax.random.PRNGKey(0)
    kx, kw1, kb1, kw2, kb2 = jax.random.split(key, 5)

    x = jax.random.normal(kx, (batch, input_dim), dtype=jnp.float32)

    # Deterministic PyTorch-like uniform fan-in init.
    bound1 = 1.0 / (input_dim ** 0.5)
    w1 = jax.random.uniform(kw1, (hidden_dim, input_dim), jnp.float32, -bound1, bound1)
    b1 = jax.random.uniform(kb1, (hidden_dim,), jnp.float32, -bound1, bound1)
    bound2 = 1.0 / (hidden_dim ** 0.5)
    w2 = jax.random.uniform(kw2, (input_dim, hidden_dim), jnp.float32, -bound2, bound2)
    b2 = jax.random.uniform(kb2, (input_dim,), jnp.float32, -bound2, bound2)
    gamma = jnp.ones((hidden_dim,), jnp.float32)     # BatchNorm1d weight init
    beta = jnp.zeros((hidden_dim,), jnp.float32)     # BatchNorm1d bias init

    ref = mlp_block_ref(x, w1, b1, gamma, beta, w2, b2)

    # 1) Exact path: f32 weights + f32 MXU inputs, auto tile -- tight check.
    p_f32 = prepare_mlp_params(w1, b1, gamma, beta, w2, b2, weight_dtype=jnp.float32)
    out_f32 = jax.block_until_ready(mlp_block(x, p_f32, compute_dtype=jnp.float32))
    assert out_f32.shape == (batch, input_dim)
    assert jnp.allclose(out_f32, ref, atol=1e-4, rtol=1e-4), "f32 path mismatch vs reference"

    # 2) Fast path: bf16 weights streamed from HBM + bf16 MXU, explicit H tiling
    #    (grid of 2 exercises init/accumulate/finalize) -- bf16-appropriate tolerance.
    p_bf16 = prepare_mlp_params(w1, b1, gamma, beta, w2, b2, weight_dtype=jnp.bfloat16)
    out_bf16 = jax.block_until_ready(
        mlp_block(x, p_bf16, compute_dtype=jnp.bfloat16, block_h=128))
    assert out_bf16.shape == (batch, input_dim)
    assert _rel_l2(out_bf16, ref) < 5e-2, "bf16 path mismatch vs reference"

    print("KERNEL_OK")
</pallas_src>

<mosaic_0001>
module attributes {stable_mosaic.version = 11 : i64} {
  func.func @mlp_block_kernel(%arg0: i32, %arg1: memref<128x128xf32, #tpu.memory_space<vmem>>, %arg2: memref<256x128xf32, #tpu.memory_space<vmem>>, %arg3: memref<1x256xf32, #tpu.memory_space<vmem>>, %arg4: memref<1x256xf32, #tpu.memory_space<vmem>>, %arg5: memref<1x256xf32, #tpu.memory_space<vmem>>, %arg6: memref<256x128xf32, #tpu.memory_space<vmem>>, %arg7: memref<1x128xf32, #tpu.memory_space<vmem>>, %arg8: memref<128x128xf32, #tpu.memory_space<vmem>>, %arg9: memref<128x128xf32, #tpu.memory_space<vmem>>, %arg10: memref<128x128xf32, #tpu.memory_space<vmem>>) attributes {dimension_semantics = [#tpu.dimension_semantics<arbitrary>], iteration_bounds = array<i64: 1>, scalar_prefetch = 0 : i64, scratch_operands = 2 : i64, tpu.core_type = #tpu.core_type<tc>, window_params = [{pipeline_mode = #tpu.pipeline_mode<synchronous>, transform_indices = @transform_0, window_bounds = array<i64: 128, 128>}, {pipeline_mode = #tpu.pipeline_mode<double_buffered>, transform_indices = @transform_1, window_bounds = array<i64: 256, 128>}, {transform_indices = @transform_2, window_bounds = array<i64: 1, 256>}, {transform_indices = @transform_3, window_bounds = array<i64: 1, 256>}, {transform_indices = @transform_4, window_bounds = array<i64: 1, 256>}, {pipeline_mode = #tpu.pipeline_mode<double_buffered>, transform_indices = @transform_5, window_bounds = array<i64: 256, 128>}, {pipeline_mode = #tpu.pipeline_mode<synchronous>, transform_indices = @transform_6, window_bounds = array<i64: 1, 128>}, {pipeline_mode = #tpu.pipeline_mode<synchronous>, transform_indices = @transform_7, window_bounds = array<i64: 128, 128>}]} {
    %c0_i32 = arith.constant 0 : i32
    %0 = arith.cmpi eq, %arg0, %c0_i32 : i32
    %1 = arith.extui %0 : i1 to i32
    %c0_i32_0 = arith.constant 0 : i32
    %2 = arith.cmpi ne, %1, %c0_i32_0 : i32
    scf.if %2 {
      %cst_25 = arith.constant 0.000000e+00 : f32
      %40 = vector.broadcast %cst_25 : f32 to vector<128x128xf32>
      %c0_26 = arith.constant 0 : index
      %c0_27 = arith.constant 0 : index
      %41 = vector.load %arg9[%c0_26, %c0_27] : memref<128x128xf32, #tpu.memory_space<vmem>>, vector<128x128xf32>
      tpu.vector_store %arg9[%c0_26, %c0_27], %40 {strides = array<i32>} : memref<128x128xf32, #tpu.memory_space<vmem>>, vector<128x128xf32>,
      %c0_28 = arith.constant 0 : index
      %c0_29 = arith.constant 0 : index
      %42 = vector.load %arg1[%c0_28, %c0_29] : memref<128x128xf32, #tpu.memory_space<vmem>>, vector<128x128xf32>
      %c0_30 = arith.constant 0 : index
      %c0_31 = arith.constant 0 : index
      %43 = vector.load %arg10[%c0_30, %c0_31] : memref<128x128xf32, #tpu.memory_space<vmem>>, vector<128x128xf32>
      tpu.vector_store %arg10[%c0_30, %c0_31], %42 {strides = array<i32>} : memref<128x128xf32, #tpu.memory_space<vmem>>, vector<128x128xf32>,
    } else {
    }
    %c0 = arith.constant 0 : index
    %c0_1 = arith.constant 0 : index
    %3 = vector.load %arg2[%c0, %c0_1] : memref<256x128xf32, #tpu.memory_space<vmem>>, vector<256x128xf32>
    %c0_2 = arith.constant 0 : index
    %c0_3 = arith.constant 0 : index
    %4 = vector.load %arg10[%c0_2, %c0_3] : memref<128x128xf32, #tpu.memory_space<vmem>>, vector<128x128xf32>
    %cst = arith.constant dense<0.000000e+00> : vector<128x256xf32>
    %5 = tpu.matmul %4, %3, %cst {dimension_numbers = #tpu.dot_dimension_numbers<[1], [1], [0], [0], [0, 0, 1, 0], [], []>} : vector<128x128xf32>, vector<256x128xf32>, vector<128x256xf32> -> vector<128x256xf32>
    %c0_4 = arith.constant 0 : index
    %c0_5 = arith.constant 0 : index
    %6 = vector.load %arg3[%c0_4, %c0_5] : memref<1x256xf32, #tpu.memory_space<vmem>>, vector<1x256xf32>
    %7 = vector.broadcast %6 : vector<1x256xf32> to vector<128x256xf32>
    %8 = arith.addf %5, %7 : vector<128x256xf32>
    %cst_6 = arith.constant dense<0.000000e+00> : vector<256xf32>
    %9 = vector.multi_reduction <add>, %8, %cst_6 [0] : vector<128x256xf32> to vector<256xf32>
    %10 = vector.shape_cast %9 : vector<256xf32> to vector<1x256xf32>
    %cst_7 = arith.constant 7.812500e-03 : f32
    %11 = vector.broadcast %cst_7 : f32 to vector<1x256xf32>
    %12 = arith.mulf %10, %11 : vector<1x256xf32>
    %13 = vector.broadcast %12 : vector<1x256xf32> to vector<128x256xf32>
    %14 = arith.subf %8, %13 : vector<128x256xf32>
    %15 = arith.mulf %14, %14 : vector<128x256xf32>
    %cst_8 = arith.constant dense<0.000000e+00> : vector<256xf32>
    %16 = vector.multi_reduction <add>, %15, %cst_8 [0] : vector<128x256xf32> to vector<256xf32>
    %17 = vector.shape_cast %16 : vector<256xf32> to vector<1x256xf32>
    %cst_9 = arith.constant 7.812500e-03 : f32
    %18 = vector.broadcast %cst_9 : f32 to vector<1x256xf32>
    %19 = arith.mulf %17, %18 : vector<1x256xf32>
    %c0_10 = arith.constant 0 : index
    %c0_11 = arith.constant 0 : index
    %20 = vector.load %arg4[%c0_10, %c0_11] : memref<1x256xf32, #tpu.memory_space<vmem>>, vector<1x256xf32>
    %cst_12 = arith.constant 9.99999974E-6 : f32
    %21 = vector.broadcast %cst_12 : f32 to vector<1x256xf32>
    %22 = arith.addf %19, %21 : vector<1x256xf32>
    %23 = math.rsqrt %22 : vector<1x256xf32>
    %24 = arith.mulf %20, %23 : vector<1x256xf32>
    %25 = vector.broadcast %24 : vector<1x256xf32> to vector<128x256xf32>
    %26 = arith.mulf %14, %25 : vector<128x256xf32>
    %c0_13 = arith.constant 0 : index
    %c0_14 = arith.constant 0 : index
    %27 = vector.load %arg5[%c0_13, %c0_14] : memref<1x256xf32, #tpu.memory_space<vmem>>, vector<1x256xf32>
    %28 = vector.broadcast %27 : vector<1x256xf32> to vector<128x256xf32>
    %29 = arith.addf %26, %28 : vector<128x256xf32>
    %cst_15 = arith.constant 0.000000e+00 : f32
    %30 = vector.broadcast %cst_15 : f32 to vector<128x256xf32>
    %31 = arith.maximumf %29, %30 : vector<128x256xf32>
    %c0_16 = arith.constant 0 : index
    %c0_17 = arith.constant 0 : index
    %32 = vector.load %arg6[%c0_16, %c0_17] : memref<256x128xf32, #tpu.memory_space<vmem>>, vector<256x128xf32>
    %c0_18 = arith.constant 0 : index
    %c0_19 = arith.constant 0 : index
    %33 = vector.load %arg9[%c0_18, %c0_19] : memref<128x128xf32, #tpu.memory_space<vmem>>, vector<128x128xf32>
    %cst_20 = arith.constant dense<0.000000e+00> : vector<128x128xf32>
    %34 = tpu.matmul %31, %32, %cst_20 {dimension_numbers = #tpu.dot_dimension_numbers<[1], [0], [0], [1], [0, 0, 1, 1], [], []>} : vector<128x256xf32>, vector<256x128xf32>, vector<128x128xf32> -> vector<128x128xf32>
    %35 = arith.addf %33, %34 : vector<128x128xf32>
    %c0_21 = arith.constant 0 : index
    %c0_22 = arith.constant 0 : index
    %36 = vector.load %arg9[%c0_21, %c0_22] : memref<128x128xf32, #tpu.memory_space<vmem>>, vector<128x128xf32>
    tpu.vector_store %arg9[%c0_21, %c0_22], %35 {strides = array<i32>} : memref<128x128xf32, #tpu.memory_space<vmem>>, vector<128x128xf32>,
    %c0_i32_23 = arith.constant 0 : i32
    %37 = arith.cmpi eq, %arg0, %c0_i32_23 : i32
    %38 = arith.extui %37 : i1 to i32
    %c0_i32_24 = arith.constant 0 : i32
    %39 = arith.cmpi ne, %38, %c0_i32_24 : i32
    scf.if %39 {
      %c0_25 = arith.constant 0 : index
      %c0_26 = arith.constant 0 : index
      %40 = vector.load %arg9[%c0_25, %c0_26] : memref<128x128xf32, #tpu.memory_space<vmem>>, vector<128x128xf32>
      %c0_27 = arith.constant 0 : index
      %c0_28 = arith.constant 0 : index
      %41 = vector.load %arg7[%c0_27, %c0_28] : memref<1x128xf32, #tpu.memory_space<vmem>>, vector<1x128xf32>
      %42 = vector.broadcast %41 : vector<1x128xf32> to vector<128x128xf32>
      %43 = arith.addf %40, %42 : vector<128x128xf32>
      %c0_29 = arith.constant 0 : index
      %c0_30 = arith.constant 0 : index
      %44 = vector.load %arg1[%c0_29, %c0_30] : memref<128x128xf32, #tpu.memory_space<vmem>>, vector<128x128xf32>
      %45 = arith.addf %43, %44 : vector<128x128xf32>
      %c0_31 = arith.constant 0 : index
      %c0_32 = arith.constant 0 : index
      %46 = vector.load %arg8[%c0_31, %c0_32] : memref<128x128xf32, #tpu.memory_space<vmem>>, vector<128x128xf32>
      tpu.vector_store %arg8[%c0_31, %c0_32], %45 {strides = array<i32>} : memref<128x128xf32, #tpu.memory_space<vmem>>, vector<128x128xf32>,
    } else {
    }
    return
  }
  func.func @transform_0(%arg0: i32) -> (i32, i32) {
    %c0_i32 = arith.constant 0 : i32
    %c0_i32_0 = arith.constant 0 : i32
    %c0_i32_1 = arith.constant 0 : i32
    return %c0_i32, %c0_i32_0 : i32, i32
  }
  func.func @transform_1(%arg0: i32) -> (i32, i32) {
    %c0_i32 = arith.constant 0 : i32
    %c0_i32_0 = arith.constant 0 : i32
    return %arg0, %c0_i32 : i32, i32
  }
  func.func @transform_2(%arg0: i32) -> (i32, i32) {
    %c0_i32 = arith.constant 0 : i32
    %c0_i32_0 = arith.constant 0 : i32
    return %c0_i32, %arg0 : i32, i32
  }
  func.func @transform_3(%arg0: i32) -> (i32, i32) {
    %c0_i32 = arith.constant 0 : i32
    %c0_i32_0 = arith.constant 0 : i32
    return %c0_i32, %arg0 : i32, i32
  }
  func.func @transform_4(%arg0: i32) -> (i32, i32) {
    %c0_i32 = arith.constant 0 : i32
    %c0_i32_0 = arith.constant 0 : i32
    return %c0_i32, %arg0 : i32, i32
  }
  func.func @transform_5(%arg0: i32) -> (i32, i32) {
    %c0_i32 = arith.constant 0 : i32
    %c0_i32_0 = arith.constant 0 : i32
    return %arg0, %c0_i32 : i32, i32
  }
  func.func @transform_6(%arg0: i32) -> (i32, i32) {
    %c0_i32 = arith.constant 0 : i32
    %c0_i32_0 = arith.constant 0 : i32
    %c0_i32_1 = arith.constant 0 : i32
    return %c0_i32, %c0_i32_0 : i32, i32
  }
  func.func @transform_7(%arg0: i32) -> (i32, i32) {
    %c0_i32 = arith.constant 0 : i32
    %c0_i32_0 = arith.constant 0 : i32
    %c0_i32_1 = arith.constant 0 : i32
    return %c0_i32, %c0_i32_0 : i32, i32
  }
}

</mosaic_0001>

<llo_original>
// kernel: tpu_custom_call.1
$region0: #{tpu_custom_call.1}
  #allocation0 [shape = 'u32[]', space=smem, size = 0x4, offset = 0x4, fixed_abs, tag = 'smem constant byte address 0x4 - core index']
  #allocation1 [shape = 'u32[144,128]{1,0:T(1,128)}', space=vmem, size = 0x12000, scoped, tag = 'internal scratch']
  #allocation2 [shape = 'f32[128,128]{1,0:T(8,128)}', space=vmem, size = 0x10000, scoped, tag = 'scratch operand']
  #allocation3 [shape = 'f32[128,128]{1,0:T(8,128)}', space=vmem, size = 0x10000, scoped, tag = 'scratch operand']
  %s0 = inlined_call_operand.hbm [shape: f32[128,128], index: 0, kind: input, shape index: {}]
  %s1 = inlined_call_operand.hbm [shape: f32[256,128], index: 1, kind: input, shape index: {}]
  %s2 = inlined_call_operand.vmem [shape: f32[1,256], index: 2, kind: input, shape index: {}]
  %s3 = inlined_call_operand.vmem [shape: f32[1,256], index: 3, kind: input, shape index: {}]
  %s4 = inlined_call_operand.vmem [shape: f32[1,256], index: 4, kind: input, shape index: {}]
  %s5 = inlined_call_operand.hbm [shape: f32[256,128], index: 5, kind: input, shape index: {}]
  %s6 = inlined_call_operand.vmem [shape: f32[1,128], index: 6, kind: input, shape index: {}]
  %s7 = inlined_call_operand.hbm [shape: f32[128,128], index: 7, kind: output, shape index: {}]
  %s8 = sld [smem:[#allocation0]]
  $region58: #{tpu_custom_call.1} parent=0
    _
  %s10 = ssub.s32 1, %s8
  %s11 = scalar_select 0, %s10, %s8
  $region1: #{tpu_custom_call.1} parent=0
    #allocation4 [shape = 'u8[65536]{0}', space=vmem, size = 0x10000, scoped, tag = 'input window, operand 0, single buffered']
    #allocation5 [shape = 's32[1]{0}', space=sflag, size = 0x4, scoped, tag = 'scoped memory for tpu_custom_call.1']
    #allocation6 [shape = 's32[1]{0}', space=sflag, size = 0x4, scoped, tag = 'scoped memory for tpu_custom_call.1']
    #allocation7 [shape = 'u8[131072]{0}', space=vmem, size = 0x20000, scoped, tag = 'input window, operand 1, single buffered']
    #allocation8 [shape = 's32[1]{0}', space=sflag, size = 0x4, scoped, tag = 'scoped memory for tpu_custom_call.1']
    #allocation9 [shape = 'u8[131072]{0}', space=vmem, size = 0x20000, scoped, tag = 'input window, operand 5, single buffered']
    #allocation10 [shape = 'u8[65536]{0}', space=vmem, size = 0x10000, scoped, tag = 'output window, operand 0, single buffered']
    %12 = vsyncpa [#allocation5], 0
    %13 = vsyncpa [#allocation8], 0
    %14 = vsyncpa [#allocation6], 0
    // Predicated region
    $region2: #{tpu_custom_call.1} parent=1 // pred_check
      _
    $region3: #{tpu_custom_call.1} parent=1 // pred_check_branch
      %16 = sbr.rel (0) target = $region5
    $region4: #{tpu_custom_call.1} parent=1 // pred_region
      %s18 = ssub.s32 2048, 2048
      %19 = vsyncadd [#allocation5], %s18
      %s20 = sshll.u32 [#allocation4], 4
      %s21 = int_to_ptr.vmem [resolvable:$true] %s20
      %26 = dma.hbm_to_vmem [thread:$0]  %s0, 2048, %s21, [#allocation5], 128, 128, 8
    $region5: #{tpu_custom_call.1} parent=1 // pred_fallthru
      _
    // Predicated region
    $region6: #{tpu_custom_call.1} parent=1 // pred_check
      _
    $region7: #{tpu_custom_call.1} parent=1 // pred_check_branch
      %28 = sbr.rel (0) target = $region9
    $region8: #{tpu_custom_call.1} parent=1 // pred_region
      %s30 = ssub.s32 4096, 4096
      %31 = vsyncadd [#allocation8], %s30
      %s32 = sshll.u32 [#allocation7], 4
      %s33 = int_to_ptr.vmem [resolvable:$true] %s32
      %38 = dma.hbm_to_vmem [thread:$0]  %s1, 4096, %s33, [#allocation8], 128, 128, 8
    $region9: #{tpu_custom_call.1} parent=1 // pred_fallthru
      _
    // Predicated region
    $region10: #{tpu_custom_call.1} parent=1 // pred_check
      _
    $region11: #{tpu_custom_call.1} parent=1 // pred_check_branch
      %40 = sbr.rel (0) target = $region13
    $region12: #{tpu_custom_call.1} parent=1 // pred_region
      _
    $region13: #{tpu_custom_call.1} parent=1 // pred_fallthru
      _
    // Predicated region
    $region14: #{tpu_custom_call.1} parent=1 // pred_check
      _
    $region15: #{tpu_custom_call.1} parent=1 // pred_check_branch
      %42 = sbr.rel (0) target = $region17
    $region16: #{tpu_custom_call.1} parent=1 // pred_region
      _
    $region17: #{tpu_custom_call.1} parent=1 // pred_fallthru
      _
    // Predicated region
    $region18: #{tpu_custom_call.1} parent=1 // pred_check
      _
    $region19: #{tpu_custom_call.1} parent=1 // pred_check_branch
      %44 = sbr.rel (0) target = $region21
    $region20: #{tpu_custom_call.1} parent=1 // pred_region
      _
    $region21: #{tpu_custom_call.1} parent=1 // pred_fallthru
      _
    // Predicated region
    $region22: #{tpu_custom_call.1} parent=1 // pred_check
      _
    $region23: #{tpu_custom_call.1} parent=1 // pred_check_branch
      %46 = sbr.rel (0) target = $region25
    $region24: #{tpu_custom_call.1} parent=1 // pred_region
      %s48 = ssub.s32 4096, 4096
      %49 = vsyncadd [#allocation8], %s48
      %s50 = sshll.u32 [#allocation9], 4
      %s51 = int_to_ptr.vmem [resolvable:$true] %s50
      %56 = dma.hbm_to_vmem [thread:$0]  %s5, 4096, %s51, [#allocation8], 128, 128, 8
    $region25: #{tpu_custom_call.1} parent=1 // pred_fallthru
      _
    // Predicated region
    $region26: #{tpu_custom_call.1} parent=1 // pred_check
      _
    $region27: #{tpu_custom_call.1} parent=1 // pred_check_branch
      %58 = sbr.rel (0) target = $region29
    $region28: #{tpu_custom_call.1} parent=1 // pred_region
      _
    $region29: #{tpu_custom_call.1} parent=1 // pred_fallthru
      _
    // Predicated region
    $region30: #{tpu_custom_call.1} parent=1 // pred_check
      _
    $region31: #{tpu_custom_call.1} parent=1 // pred_check_branch
      %60 = sbr.rel (0) target = $region33
    $region32: #{tpu_custom_call.1} parent=1 // pred_region
      %61 = dma.done [#allocation5], 2048
    $region33: #{tpu_custom_call.1} parent=1 // pred_fallthru
      _
    // Predicated region
    $region34: #{tpu_custom_call.1} parent=1 // pred_check
      _
    $region35: #{tpu_custom_call.1} parent=1 // pred_check_branch
      %63 = sbr.rel (0) target = $region37
    $region36: #{tpu_custom_call.1} parent=1 // pred_region
      %64 = dma.done [#allocation8], 4096
    $region37: #{tpu_custom_call.1} parent=1 // pred_fallthru
      _
    // Predicated region
    $region38: #{tpu_custom_call.1} parent=1 // pred_check
      _
    $region39: #{tpu_custom_call.1} parent=1 // pred_check_branch
      %66 = sbr.rel (0) target = $region41
    $region40: #{tpu_custom_call.1} parent=1 // pred_region
      %67 = dma.done [#allocation8], 4096
    $region41: #{tpu_custom_call.1} parent=1 // pred_fallthru
      _
    %p68 = scmp.eq.s32.totalorder 0, 0
    // Predicated region
    $region42: #{tpu_custom_call.1} parent=1 // pred_check
      %p69 = pneg %p68
    $region43: #{tpu_custom_call.1} parent=1 // pred_check_branch
      %71 = sbr.rel (%p69) target = $region45
    $region44: #{tpu_custom_call.1} parent=1 // pred_region
      %72 = vst [vmem:[#allocation2] sm:$0xff] 0.0
      %73 = vst [vmem:[#allocation2 + $0x8] sm:$0xff] 0.0
      %74 = vst [vmem:[#allocation2 + $0x10] sm:$0xff] 0.0
      %75 = vst [vmem:[#allocation2 + $0x18] sm:$0xff] 0.0
      %76 = vst [vmem:[#allocation2 + $0x20] sm:$0xff] 0.0
      %77 = vst [vmem:[#allocation2 + $0x28] sm:$0xff] 0.0
      %78 = vst [vmem:[#allocation2 + $0x30] sm:$0xff] 0.0
      %79 = vst [vmem:[#allocation2 + $0x38] sm:$0xff] 0.0
      %80 = vst [vmem:[#allocation2 + $0x40] sm:$0xff] 0.0
      %81 = vst [vmem:[#allocation2 + $0x48] sm:$0xff] 0.0
      %82 = vst [vmem:[#allocation2 + $0x50] sm:$0xff] 0.0
      %83 = vst [vmem:[#allocation2 + $0x58] sm:$0xff] 0.0
      %84 = vst [vmem:[#allocation2 + $0x60] sm:$0xff] 0.0
      %85 = vst [vmem:[#allocation2 + $0x68] sm:$0xff] 0.0
      %86 = vst [vmem:[#allocation2 + $0x70] sm:$0xff] 0.0
      %87 = vst [vmem:[#allocation2 + $0x78] sm:$0xff] 0.0
      %v88 = vld [vmem:[#allocation4] sm:$0xff]
      %v89 = vld [vmem:[#allocation4 + $0x8] sm:$0xff]
      %v90 = vld [vmem:[#allocation4 + $0x10] sm:$0xff]
      %v91 = vld [vmem:[#allocation4 + $0x18] sm:$0xff]
      %v92 = vld [vmem:[#allocation4 + $0x20] sm:$0xff]
      %v93 = vld [vmem:[#allocation4 + $0x28] sm:$0xff]
      %v94 = vld [vmem:[#allocation4 + $0x30] sm:$0xff]
      %v95 = vld [vmem:[#allocation4 + $0x38] sm:$0xff]
      %v96 = vld [vmem:[#allocation4 + $0x40] sm:$0xff]
      %v97 = vld [vmem:[#allocation4 + $0x48] sm:$0xff]
      %v98 = vld [vmem:[#allocation4 + $0x50] sm:$0xff]
      %v99 = vld [vmem:[#allocation4 + $0x58] sm:$0xff]
      %v100 = vld [vmem:[#allocation4 + $0x60] sm:$0xff]
      %v101 = vld [vmem:[#allocation4 + $0x68] sm:$0xff]
      %v102 = vld [vmem:[#allocation4 + $0x70] sm:$0xff]
      %v103 = vld [vmem:[#allocation4 + $0x78] sm:$0xff]
      %104 = vst [vmem:[#allocation3] sm:$0xff] %v88
      %105 = vst [vmem:[#allocation3 + $0x8] sm:$0xff] %v89
      %106 = vst [vmem:[#allocation3 + $0x10] sm:$0xff] %v90
      %107 = vst [vmem:[#allocation3 + $0x18] sm:$0xff] %v91
      %108 = vst [vmem:[#allocation3 + $0x20] sm:$0xff] %v92
      %109 = vst [vmem:[#allocation3 + $0x28] sm:$0xff] %v93
      %110 = vst [vmem:[#allocation3 + $0x30] sm:$0xff] %v94
      %111 = vst [vmem:[#allocation3 + $0x38] sm:$0xff] %v95
      %112 = vst [vmem:[#allocation3 + $0x40] sm:$0xff] %v96
      %113 = vst [vmem:[#allocation3 + $0x48] sm:$0xff] %v97
      %114 = vst [vmem:[#allocation3 + $0x50] sm:$0xff] %v98
      %115 = vst [vmem:[#allocation3 + $0x58] sm:$0xff] %v99
      %116 = vst [vmem:[#allocation3 + $0x60] sm:$0xff] %v100
      %117 = vst [vmem:[#allocation3 + $0x68] sm:$0xff] %v101
      %118 = vst [vmem:[#allocation3 + $0x70] sm:$0xff] %v102
      %119 = vst [vmem:[#allocation3 + $0x78] sm:$0xff] %v103
    $region45: #{tpu_custom_call.1} parent=1 // pred_fallthru
      _
    %v120 = vld [vmem:[#allocation7] sm:$0xff]
    %v121 = vld [vmem:[#allocation7 + $0x8] sm:$0xff]
    %v122 = vld [vmem:[#allocation7 + $0x10] sm:$0xff]
    %v123 = vld [vmem:[#allocation7 + $0x18] sm:$0xff]
    %v124 = vld [vmem:[#allocation7 + $0x20] sm:$0xff]
    %v125 = vld [vmem:[#allocation7 + $0x28] sm:$0xff]
    %v126 = vld [vmem:[#allocation7 + $0x30] sm:$0xff]
    %v127 = vld [vmem:[#allocation7 + $0x38] sm:$0xff]
    %v128 = vld [vmem:[#allocation7 + $0x40] sm:$0xff]
    %v129 = vld [vmem:[#allocation7 + $0x48] sm:$0xff]
    %v130 = vld [vmem:[#allocation7 + $0x50] sm:$0xff]
    %v131 = vld [vmem:[#allocation7 + $0x58] sm:$0xff]
    %v132 = vld [vmem:[#allocation7 + $0x60] sm:$0xff]
    %v133 = vld [vmem:[#allocation7 + $0x68] sm:$0xff]
    %v134 = vld [vmem:[#allocation7 + $0x70] sm:$0xff]
    %v135 = vld [vmem:[#allocation7 + $0x78] sm:$0xff]
    %v136 = vld [vmem:[#allocation7 + $0x80] sm:$0xff]
    %v137 = vld [vmem:[#allocation7 + $0x88] sm:$0xff]
    %v138 = vld [vmem:[#allocation7 + $0x90] sm:$0xff]
    %v139 = vld [vmem:[#allocation7 + $0x98] sm:$0xff]
    %v140 = vld [vmem:[#allocation7 + $0xa0] sm:$0xff]
    %v141 = vld [vmem:[#allocation7 + $0xa8] sm:$0xff]
    %v142 = vld [vmem:[#allocation7 + $0xb0] sm:$0xff]
    %v143 = vld [vmem:[#allocation7 + $0xb8] sm:$0xff]
    %v144 = vld [vmem:[#allocation7 + $0xc0] sm:$0xff]
    %v145 = vld [vmem:[#allocation7 + $0xc8] sm:$0xff]
    %v146 = vld [vmem:[#allocation7 + $0xd0] sm:$0xff]
    %v147 = vld [vmem:[#allocation7 + $0xd8] sm:$0xff]
    %v148 = vld [vmem:[#allocation7 + $0xe0] sm:$0xff]
    %v149 = vld [vmem:[#allocation7 + $0xe8] sm:$0xff]
    %v150 = vld [vmem:[#allocation7 + $0xf0] sm:$0xff]
    %v151 = vld [vmem:[#allocation7 + $0xf8] sm:$0xff]
    %v152 = vld [vmem:[#allocation3] sm:$0xff]
    %v153 = vld [vmem:[#allocation3 + $0x8] sm:$0xff]
    %v154 = vld [vmem:[#allocation3 + $0x10] sm:$0xff]
    %v155 = vld [vmem:[#allocation3 + $0x18] sm:$0xff]
    %v156 = vld [vmem:[#allocation3 + $0x20] sm:$0xff]
    %v157 = vld [vmem:[#allocation3 + $0x28] sm:$0xff]
    %v158 = vld [vmem:[#allocation3 + $0x30] sm:$0xff]
    %v159 = vld [vmem:[#allocation3 + $0x38] sm:$0xff]
    %v160 = vld [vmem:[#allocation3 + $0x40] sm:$0xff]
    %v161 = vld [vmem:[#allocation3 + $0x48] sm:$0xff]
    %v162 = vld [vmem:[#allocation3 + $0x50] sm:$0xff]
    %v163 = vld [vmem:[#allocation3 + $0x58] sm:$0xff]
    %v164 = vld [vmem:[#allocation3 + $0x60] sm:$0xff]
    %v165 = vld [vmem:[#allocation3 + $0x68] sm:$0xff]
    %v166 = vld [vmem:[#allocation3 + $0x70] sm:$0xff]
    %v167 = vld [vmem:[#allocation3 + $0x78] sm:$0xff]
    %v168 = vld [vmem:[%s2] sm:$0x3]
    %v170 = vlaneseq
    %v171 = vshrl.u32 %v170, 7
    %v172 = vsub.s32 0, %v171
    %v173 = vrot.slane %v168, %v172
    %v174 = vlaneseq
    %v175 = vshrl.u32 %v174, 7
    %v176 = vsub.s32 1, %v175
    %v177 = vrot.slane %v168, %v176
    %180 = vmatprep.subr.mxu0 0.0
    %181 = vmatpush1.xpose.msra.mxu0 %v135
    %182 = vmatprep.subr.mxu0 0.0
    %183 = vmatpush1.xpose.msra.mxu0 %v134
    %184 = vmatprep.subr.mxu0 0.0
    %185 = vmatpush1.xpose.msra.mxu0 %v133
    %186 = vmatprep.subr.mxu0 0.0
    %187 = vmatpush1.xpose.msra.mxu0 %v132
    %188 = vmatprep.subr.mxu0 0.0
    %189 = vmatpush1.xpose.msra.mxu0 %v131
    %190 = vmatprep.subr.mxu0 0.0
    %191 = vmatpush1.xpose.msra.mxu0 %v130
    %192 = vmatprep.subr.mxu0 0.0
    %193 = vmatpush1.xpose.msra.mxu0 %v129
    %194 = vmatprep.subr.mxu0 0.0
    %195 = vmatpush1.xpose.msra.mxu0 %v128
    %196 = vmatprep.subr.mxu0 0.0
    %197 = vmatpush1.xpose.msra.mxu0 %v127
    %198 = vmatprep.subr.mxu0 0.0
    %199 = vmatpush1.xpose.msra.mxu0 %v126
    %200 = vmatprep.subr.mxu0 0.0
    %201 = vmatpush1.xpose.msra.mxu0 %v125
    %202 = vmatprep.subr.mxu0 0.0
    %203 = vmatpush1.xpose.msra.mxu0 %v124
    %204 = vmatprep.subr.mxu0 0.0
    %205 = vmatpush1.xpose.msra.mxu0 %v123
    %206 = vmatprep.subr.mxu0 0.0
    %207 = vmatpush1.xpose.msra.mxu0 %v122
    %208 = vmatprep.subr.mxu0 0.0
    %209 = vmatpush1.xpose.msra.mxu0 %v121
    %210 = vmatprep.subr.mxu0 0.0
    %211 = vmatpush1.xpose.msra.mxu0 %v120
    %212 = vmatprep.subr.mxu0 0.0
    %213 = vmatpush2.xpose.msra.mxu0 %v151
    %214 = vmatprep.subr.mxu0 0.0
    %215 = vmatpush2.xpose.msra.mxu0 %v150
    %216 = vmatprep.subr.mxu0 0.0
    %217 = vmatpush2.xpose.msra.mxu0 %v149
    %218 = vmatprep.subr.mxu0 0.0
    %219 = vmatpush2.xpose.msra.mxu0 %v148
    %220 = vmatprep.subr.mxu0 0.0
    %221 = vmatpush2.xpose.msra.mxu0 %v147
    %222 = vmatprep.subr.mxu0 0.0
    %223 = vmatpush2.xpose.msra.mxu0 %v146
    %224 = vmatprep.subr.mxu0 0.0
    %225 = vmatpush2.xpose.msra.mxu0 %v145
    %226 = vmatprep.subr.mxu0 0.0
    %227 = vmatpush2.xpose.msra.mxu0 %v144
    %228 = vmatprep.subr.mxu0 0.0
    %229 = vmatpush2.xpose.msra.mxu0 %v143
    %230 = vmatprep.subr.mxu0 0.0
    %231 = vmatpush2.xpose.msra.mxu0 %v142
    %232 = vmatprep.subr.mxu0 0.0
    %233 = vmatpush2.xpose.msra.mxu0 %v141
    %234 = vmatprep.subr.mxu0 0.0
    %235 = vmatpush2.xpose.msra.mxu0 %v140
    %236 = vmatprep.subr.mxu0 0.0
    %237 = vmatpush2.xpose.msra.mxu0 %v139
    %238 = vmatprep.subr.mxu0 0.0
    %239 = vmatpush2.xpose.msra.mxu0 %v138
    %240 = vmatprep.subr.mxu0 0.0
    %241 = vmatpush2.xpose.msra.mxu0 %v137
    %242 = vmatprep.subr.mxu0 0.0
    %243 = vmatpush2.xpose.msra.mxu0 %v136
    %244 = vmatprep.mubr.f32.mxu0 0.0
    %245 = vmatmul.mubr.f32.gmra.mxu0 %v152
    %v246 = vpop.f32.mrf.mxu0
    %v247 = vadd.f32 %v173, %v246
    %v248 = vpop.f32.mrf.mxu0
    %v249 = vadd.f32 %v177, %v248
    %250 = vmatprep.mubr.f32.mxu0 0.0
    %251 = vmatmul.mubr.f32.gmra.mxu0 %v153
    %v252 = vpop.f32.mrf.mxu0
    %v253 = vadd.f32 %v173, %v252
    %v254 = vpop.f32.mrf.mxu0
    %v255 = vadd.f32 %v177, %v254
    %256 = vmatprep.mubr.f32.mxu0 0.0
    %257 = vmatmul.mubr.f32.gmra.mxu0 %v154
    %v258 = vpop.f32.mrf.mxu0
    %v259 = vadd.f32 %v173, %v258
    %v260 = vpop.f32.mrf.mxu0
    %v261 = vadd.f32 %v177, %v260
    %262 = vmatprep.mubr.f32.mxu0 0.0
    %263 = vmatmul.mubr.f32.gmra.mxu0 %v155
    %v264 = vpop.f32.mrf.mxu0
    %v265 = vadd.f32 %v173, %v264
    %v266 = vpop.f32.mrf.mxu0
    %v267 = vadd.f32 %v177, %v266
    %268 = vmatprep.mubr.f32.mxu0 0.0
    %269 = vmatmul.mubr.f32.gmra.mxu0 %v156
    %v270 = vpop.f32.mrf.mxu0
    %v271 = vadd.f32 %v173, %v270
    %v272 = vpop.f32.mrf.mxu0
    %v273 = vadd.f32 %v177, %v272
    %274 = vmatprep.mubr.f32.mxu0 0.0
    %275 = vmatmul.mubr.f32.gmra.mxu0 %v157
    %v276 = vpop.f32.mrf.mxu0
    %v277 = vadd.f32 %v173, %v276
    %v278 = vpop.f32.mrf.mxu0
    %v279 = vadd.f32 %v177, %v278
    %280 = vmatprep.mubr.f32.mxu0 0.0
    %281 = vmatmul.mubr.f32.gmra.mxu0 %v158
    %v282 = vpop.f32.mrf.mxu0
    %v283 = vadd.f32 %v173, %v282
    %v284 = vpop.f32.mrf.mxu0
    %v285 = vadd.f32 %v177, %v284
    %286 = vmatprep.mubr.f32.mxu0 0.0
    %287 = vmatmul.mubr.f32.gmra.mxu0 %v159
    %v288 = vpop.f32.mrf.mxu0
    %v289 = vadd.f32 %v173, %v288
    %v290 = vpop.f32.mrf.mxu0
    %v291 = vadd.f32 %v177, %v290
    %292 = vmatprep.mubr.f32.mxu0 0.0
    %293 = vmatmul.mubr.f32.gmra.mxu0 %v160
    %v294 = vpop.f32.mrf.mxu0
    %v295 = vadd.f32 %v173, %v294
    %v296 = vpop.f32.mrf.mxu0
    %v297 = vadd.f32 %v177, %v296
    %298 = vmatprep.mubr.f32.mxu0 0.0
    %299 = vmatmul.mubr.f32.gmra.mxu0 %v161
    %v300 = vpop.f32.mrf.mxu0
    %v301 = vadd.f32 %v173, %v300
    %v302 = vpop.f32.mrf.mxu0
    %v303 = vadd.f32 %v177, %v302
    %304 = vmatprep.mubr.f32.mxu0 0.0
    %305 = vmatmul.mubr.f32.gmra.mxu0 %v162
    %v306 = vpop.f32.mrf.mxu0
    %v307 = vadd.f32 %v173, %v306
    %v308 = vpop.f32.mrf.mxu0
    %v309 = vadd.f32 %v177, %v308
    %310 = vmatprep.mubr.f32.mxu0 0.0
    %311 = vmatmul.mubr.f32.gmra.mxu0 %v163
    %v312 = vpop.f32.mrf.mxu0
    %v313 = vadd.f32 %v173, %v312
    %v314 = vpop.f32.mrf.mxu0
    %v315 = vadd.f32 %v177, %v314
    %316 = vmatprep.mubr.f32.mxu0 0.0
    %317 = vmatmul.mubr.f32.gmra.mxu0 %v164
    %v318 = vpop.f32.mrf.mxu0
    %v319 = vadd.f32 %v173, %v318
    %v320 = vpop.f32.mrf.mxu0
    %v321 = vadd.f32 %v177, %v320
    %322 = vmatprep.mubr.f32.mxu0 0.0
    %323 = vmatmul.mubr.f32.gmra.mxu0 %v165
    %v324 = vpop.f32.mrf.mxu0
    %v325 = vadd.f32 %v173, %v324
    %v326 = vpop.f32.mrf.mxu0
    %v327 = vadd.f32 %v177, %v326
    %328 = vmatprep.mubr.f32.mxu0 0.0
    %329 = vmatmul.mubr.f32.gmra.mxu0 %v166
    %v330 = vpop.f32.mrf.mxu0
    %v331 = vadd.f32 %v173, %v330
    %v332 = vpop.f32.mrf.mxu0
    %v333 = vadd.f32 %v177, %v332
    %334 = vmatprep.mubr.f32.mxu0 0.0
    %335 = vmatmul.mubr.f32.gmra.mxu0 %v167
    %v336 = vpop.f32.mrf.mxu0
    %v337 = vadd.f32 %v173, %v336
    %v338 = vpop.f32.mrf.mxu0
    %v339 = vadd.f32 %v177, %v338
    %340 = vdwg.mxu0
    %v341 = vadd.f32 %v247, %v253
    %v342 = vadd.f32 %v341, %v259
    %v343 = vadd.f32 %v342, %v265
    %v344 = vadd.f32 %v343, %v271
    %v345 = vadd.f32 %v344, %v277
    %v346 = vadd.f32 %v345, %v283
    %v347 = vadd.f32 %v346, %v289
    %v348 = vadd.f32 %v347, %v295
    %v349 = vadd.f32 %v348, %v301
    %v350 = vadd.f32 %v349, %v307
    %v351 = vadd.f32 %v350, %v313
    %v352 = vadd.f32 %v351, %v319
    %v353 = vadd.f32 %v352, %v325
    %v354 = vadd.f32 %v353, %v331
    %v355 = vadd.f32 %v354, %v337
    %v356 = vrot.slane %v355, 4
    %v357 = vadd.f32 %v355, %v356
    %v358 = vrot.slane %v357, 2
    %v359 = vadd.f32 %v357, %v358
    %v360 = vrot.slane %v359, 1
    %v361 = vadd.f32 %v359, %v360
    %v362 = vadd.f32 %v249, %v255
    %v363 = vadd.f32 %v362, %v261
    %v364 = vadd.f32 %v363, %v267
    %v365 = vadd.f32 %v364, %v273
    %v366 = vadd.f32 %v365, %v279
    %v367 = vadd.f32 %v366, %v285
    %v368 = vadd.f32 %v367, %v291
    %v369 = vadd.f32 %v368, %v297
    %v370 = vadd.f32 %v369, %v303
    %v371 = vadd.f32 %v370, %v309
    %v372 = vadd.f32 %v371, %v315
    %v373 = vadd.f32 %v372, %v321
    %v374 = vadd.f32 %v373, %v327
    %v375 = vadd.f32 %v374, %v333
    %v376 = vadd.f32 %v375, %v339
    %v377 = vrot.slane %v376, 4
    %v378 = vadd.f32 %v376, %v377
    %v379 = vrot.slane %v378, 2
    %v380 = vadd.f32 %v378, %v379
    %v381 = vrot.slane %v380, 1
    %v382 = vadd.f32 %v380, %v381
    %v383 = vmul.f32 %v361, 0.0078125
    %v384 = vmul.f32 %v382, 0.0078125
    %v385 = vsub.f32 %v247, %v383
    %v386 = vsub.f32 %v249, %v384
    %v387 = vsub.f32 %v253, %v383
    %v388 = vsub.f32 %v255, %v384
    %v389 = vsub.f32 %v259, %v383
    %v390 = vsub.f32 %v261, %v384
    %v391 = vsub.f32 %v265, %v383
    %v392 = vsub.f32 %v267, %v384
    %v393 = vsub.f32 %v271, %v383
    %v394 = vsub.f32 %v273, %v384
    %v395 = vsub.f32 %v277, %v383
    %v396 = vsub.f32 %v279, %v384
    %v397 = vsub.f32 %v283, %v383
    %v398 = vsub.f32 %v285, %v384
    %v399 = vsub.f32 %v289, %v383
    %v400 = vsub.f32 %v291, %v384
    %v401 = vsub.f32 %v295, %v383
    %v402 = vsub.f32 %v297, %v384
    %v403 = vsub.f32 %v301, %v383
    %v404 = vsub.f32 %v303, %v384
    %v405 = vsub.f32 %v307, %v383
    %v406 = vsub.f32 %v309, %v384
    %v407 = vsub.f32 %v313, %v383
    %v408 = vsub.f32 %v315, %v384
    %v409 = vsub.f32 %v319, %v383
    %v410 = vsub.f32 %v321, %v384
    %v411 = vsub.f32 %v325, %v383
    %v412 = vsub.f32 %v327, %v384
    %v413 = vsub.f32 %v331, %v383
    %v414 = vsub.f32 %v333, %v384
    %v415 = vsub.f32 %v337, %v383
    %v416 = vsub.f32 %v339, %v384
    %v417 = vmul.f32 %v385, %v385
    %v418 = vmul.f32 %v386, %v386
    %v419 = vmul.f32 %v387, %v387
    %v420 = vmul.f32 %v388, %v388
    %v421 = vmul.f32 %v389, %v389
    %v422 = vmul.f32 %v390, %v390
    %v423 = vmul.f32 %v391, %v391
    %v424 = vmul.f32 %v392, %v392
    %v425 = vmul.f32 %v393, %v393
    %v426 = vmul.f32 %v394, %v394
    %v427 = vmul.f32 %v395, %v395
    %v428 = vmul.f32 %v396, %v396
    %v429 = vmul.f32 %v397, %v397
    %v430 = vmul.f32 %v398, %v398
    %v431 = vmul.f32 %v399, %v399
    %v432 = vmul.f32 %v400, %v400
    %v433 = vmul.f32 %v401, %v401
    %v434 = vmul.f32 %v402, %v402
    %v435 = vmul.f32 %v403, %v403
    %v436 = vmul.f32 %v404, %v404
    %v437 = vmul.f32 %v405, %v405
    %v438 = vmul.f32 %v406, %v406
    %v439 = vmul.f32 %v407, %v407
    %v440 = vmul.f32 %v408, %v408
    %v441 = vmul.f32 %v409, %v409
    %v442 = vmul.f32 %v410, %v410
    %v443 = vmul.f32 %v411, %v411
    %v444 = vmul.f32 %v412, %v412
    %v445 = vmul.f32 %v413, %v413
    %v446 = vmul.f32 %v414, %v414
    %v447 = vmul.f32 %v415, %v415
    %v448 = vmul.f32 %v416, %v416
    %v449 = vadd.f32 %v417, %v419
    %v450 = vadd.f32 %v449, %v421
    %v451 = vadd.f32 %v450, %v423
    %v452 = vadd.f32 %v451, %v425
    %v453 = vadd.f32 %v452, %v427
    %v454 = vadd.f32 %v453, %v429
    %v455 = vadd.f32 %v454, %v431
    %v456 = vadd.f32 %v455, %v433
    %v457 = vadd.f32 %v456, %v435
    %v458 = vadd.f32 %v457, %v437
    %v459 = vadd.f32 %v458, %v439
    %v460 = vadd.f32 %v459, %v441
    %v461 = vadd.f32 %v460, %v443
    %v462 = vadd.f32 %v461, %v445
    %v463 = vadd.f32 %v462, %v447
    %v464 = vrot.slane %v463, 4
    %v465 = vadd.f32 %v463, %v464
    %v466 = vrot.slane %v465, 2
    %v467 = vadd.f32 %v465, %v466
    %v468 = vrot.slane %v467, 1
    %v469 = vadd.f32 %v467, %v468
    %v470 = vadd.f32 %v418, %v420
    %v471 = vadd.f32 %v470, %v422
    %v472 = vadd.f32 %v471, %v424
    %v473 = vadd.f32 %v472, %v426
    %v474 = vadd.f32 %v473, %v428
    %v475 = vadd.f32 %v474, %v430
    %v476 = vadd.f32 %v475, %v432
    %v477 = vadd.f32 %v476, %v434
    %v478 = vadd.f32 %v477, %v436
    %v479 = vadd.f32 %v478, %v438
    %v480 = vadd.f32 %v479, %v440
    %v481 = vadd.f32 %v480, %v442
    %v482 = vadd.f32 %v481, %v444
    %v483 = vadd.f32 %v482, %v446
    %v484 = vadd.f32 %v483, %v448
    %v485 = vrot.slane %v484, 4
    %v486 = vadd.f32 %v484, %v485
    %v487 = vrot.slane %v486, 2
    %v488 = vadd.f32 %v486, %v487
    %v489 = vrot.slane %v488, 1
    %v490 = vadd.f32 %v488, %v489
    %v491 = vmul.f32 %v469, 0.0078125
    %v492 = vmul.f32 %v490, 0.0078125
    %v493 = vld [vmem:[%s3] sm:$0x3]
    %v494 = vadd.f32 %v491, 1e-05
    %v495 = vadd.f32 %v492, 1e-05
    %v496 = vrsqrt.pop %v494
    %v497 = vrsqrt.pop %v495
    %v500 = vcombine.low %v496, %v497
    %v502 = vunpack.c.l.s4 1966171168
    %v503 = vunpack.c.0.s8 %v502
    %v504 = vlaneseq
    %v505 = vshrl.u32 %v504, 7
    %v506 = vsub.s32 %v503, %v505
    %v507 = vrot.slane %v500, %v506
    %v509 = vunpack.c.l.s4 1966171168
    %v510 = vunpack.c.0.s8 %v509
    %v511 = vlaneseq
    %v512 = vshrl.u32 %v511, 7
    %v513 = vsub.s32 %v510, %v512
    %v514 = vrot.slane %v507, %v513
    %v516 = vmul.f32 %v493, %v514
    %v518 = vlaneseq
    %v519 = vshrl.u32 %v518, 7
    %v520 = vsub.s32 0, %v519
    %v521 = vrot.slane %v516, %v520
    %v522 = vlaneseq
    %v523 = vshrl.u32 %v522, 7
    %v524 = vsub.s32 1, %v523
    %v525 = vrot.slane %v516, %v524
    %v528 = vmul.f32 %v385, %v521
    %v529 = vmul.f32 %v386, %v525
    %v530 = vmul.f32 %v387, %v521
    %v531 = vmul.f32 %v388, %v525
    %v532 = vmul.f32 %v389, %v521
    %v533 = vmul.f32 %v390, %v525
    %v534 = vmul.f32 %v391, %v521
    %v535 = vmul.f32 %v392, %v525
    %v536 = vmul.f32 %v393, %v521
    %v537 = vmul.f32 %v394, %v525
    %v538 = vmul.f32 %v395, %v521
    %v539 = vmul.f32 %v396, %v525
    %v540 = vmul.f32 %v397, %v521
    %v541 = vmul.f32 %v398, %v525
    %v542 = vmul.f32 %v399, %v521
    %v543 = vmul.f32 %v400, %v525
    %v544 = vmul.f32 %v401, %v521
    %v545 = vmul.f32 %v402, %v525
    %v546 = vmul.f32 %v403, %v521
    %v547 = vmul.f32 %v404, %v525
    %v548 = vmul.f32 %v405, %v521
    %v549 = vmul.f32 %v406, %v525
    %v550 = vmul.f32 %v407, %v521
    %v551 = vmul.f32 %v408, %v525
    %v552 = vmul.f32 %v409, %v521
    %v553 = vmul.f32 %v410, %v525
    %v554 = vmul.f32 %v411, %v521
    %v555 = vmul.f32 %v412, %v525
    %v556 = vmul.f32 %v413, %v521
    %v557 = vmul.f32 %v414, %v525
    %v558 = vmul.f32 %v415, %v521
    %v559 = vmul.f32 %v416, %v525
    %v560 = vld [vmem:[%s4] sm:$0x3]
    %v562 = vlaneseq
    %v563 = vshrl.u32 %v562, 7
    %v564 = vsub.s32 0, %v563
    %v565 = vrot.slane %v560, %v564
    %v566 = vlaneseq
    %v567 = vshrl.u32 %v566, 7
    %v568 = vsub.s32 1, %v567
    %v569 = vrot.slane %v560, %v568
    %v572 = vadd.f32 %v528, %v565
    %v573 = vadd.f32 %v529, %v569
    %v574 = vadd.f32 %v530, %v565
    %v575 = vadd.f32 %v531, %v569
    %v576 = vadd.f32 %v532, %v565
    %v577 = vadd.f32 %v533, %v569
    %v578 = vadd.f32 %v534, %v565
    %v579 = vadd.f32 %v535, %v569
    %v580 = vadd.f32 %v536, %v565
    %v581 = vadd.f32 %v537, %v569
    %v582 = vadd.f32 %v538, %v565
    %v583 = vadd.f32 %v539, %v569
    %v584 = vadd.f32 %v540, %v565
    %v585 = vadd.f32 %v541, %v569
    %v586 = vadd.f32 %v542, %v565
    %v587 = vadd.f32 %v543, %v569
    %v588 = vadd.f32 %v544, %v565
    %v589 = vadd.f32 %v545, %v569
    %v590 = vadd.f32 %v546, %v565
    %v591 = vadd.f32 %v547, %v569
    %v592 = vadd.f32 %v548, %v565
    %v593 = vadd.f32 %v549, %v569
    %v594 = vadd.f32 %v550, %v565
    %v595 = vadd.f32 %v551, %v569
    %v596 = vadd.f32 %v552, %v565
    %v597 = vadd.f32 %v553, %v569
    %v598 = vadd.f32 %v554, %v565
    %v599 = vadd.f32 %v555, %v569
    %v600 = vadd.f32 %v556, %v565
    %v601 = vadd.f32 %v557, %v569
    %v602 = vadd.f32 %v558, %v565
    %v603 = vadd.f32 %v559, %v569
    %v604 = vmax.f32 %v572, 0.0
    %v605 = vmax.f32 %v573, 0.0
    %v606 = vmax.f32 %v574, 0.0
    %v607 = vmax.f32 %v575, 0.0
    %v608 = vmax.f32 %v576, 0.0
    %v609 = vmax.f32 %v577, 0.0
    %v610 = vmax.f32 %v578, 0.0
    %v611 = vmax.f32 %v579, 0.0
    %v612 = vmax.f32 %v580, 0.0
    %v613 = vmax.f32 %v581, 0.0
    %v614 = vmax.f32 %v582, 0.0
    %v615 = vmax.f32 %v583, 0.0
    %v616 = vmax.f32 %v584, 0.0
    %v617 = vmax.f32 %v585, 0.0
    %v618 = vmax.f32 %v586, 0.0
    %v619 = vmax.f32 %v587, 0.0
    %v620 = vmax.f32 %v588, 0.0
    %v621 = vmax.f32 %v589, 0.0
    %v622 = vmax.f32 %v590, 0.0
    %v623 = vmax.f32 %v591, 0.0
    %v624 = vmax.f32 %v592, 0.0
    %v625 = vmax.f32 %v593, 0.0
    %v626 = vmax.f32 %v594, 0.0
    %v627 = vmax.f32 %v595, 0.0
    %v628 = vmax.f32 %v596, 0.0
    %v629 = vmax.f32 %v597, 0.0
    %v630 = vmax.f32 %v598, 0.0
    %v631 = vmax.f32 %v599, 0.0
    %v632 = vmax.f32 %v600, 0.0
    %v633 = vmax.f32 %v601, 0.0
    %v634 = vmax.f32 %v602, 0.0
    %v635 = vmax.f32 %v603, 0.0
    %v636 = vld [vmem:[#allocation9] sm:$0xff]
    %v637 = vld [vmem:[#allocation9 + $0x8] sm:$0xff]
    %v638 = vld [vmem:[#allocation9 + $0x10] sm:$0xff]
    %v639 = vld [vmem:[#allocation9 + $0x18] sm:$0xff]
    %v640 = vld [vmem:[#allocation9 + $0x20] sm:$0xff]
    %v641 = vld [vmem:[#allocation9 + $0x28] sm:$0xff]
    %v642 = vld [vmem:[#allocation9 + $0x30] sm:$0xff]
    %v643 = vld [vmem:[#allocation9 + $0x38] sm:$0xff]
    %v644 = vld [vmem:[#allocation9 + $0x40] sm:$0xff]
    %v645 = vld [vmem:[#allocation9 + $0x48] sm:$0xff]
    %v646 = vld [vmem:[#allocation9 + $0x50] sm:$0xff]
    %v647 = vld [vmem:[#allocation9 + $0x58] sm:$0xff]
    %v648 = vld [vmem:[#allocation9 + $0x60] sm:$0xff]
    %v649 = vld [vmem:[#allocation9 + $0x68] sm:$0xff]
    %v650 = vld [vmem:[#allocation9 + $0x70] sm:$0xff]
    %v651 = vld [vmem:[#allocation9 + $0x78] sm:$0xff]
    %v652 = vld [vmem:[#allocation9 + $0x80] sm:$0xff]
    %v653 = vld [vmem:[#allocation9 + $0x88] sm:$0xff]
    %v654 = vld [vmem:[#allocation9 + $0x90] sm:$0xff]
    %v655 = vld [vmem:[#allocation9 + $0x98] sm:$0xff]
    %v656 = vld [vmem:[#allocation9 + $0xa0] sm:$0xff]
    %v657 = vld [vmem:[#allocation9 + $0xa8] sm:$0xff]
    %v658 = vld [vmem:[#allocation9 + $0xb0] sm:$0xff]
    %v659 = vld [vmem:[#allocation9 + $0xb8] sm:$0xff]
    %v660 = vld [vmem:[#allocation9 + $0xc0] sm:$0xff]
    %v661 = vld [vmem:[#allocation9 + $0xc8] sm:$0xff]
    %v662 = vld [vmem:[#allocation9 + $0xd0] sm:$0xff]
    %v663 = vld [vmem:[#allocation9 + $0xd8] sm:$0xff]
    %v664 = vld [vmem:[#allocation9 + $0xe0] sm:$0xff]
    %v665 = vld [vmem:[#allocation9 + $0xe8] sm:$0xff]
    %v666 = vld [vmem:[#allocation9 + $0xf0] sm:$0xff]
    %v667 = vld [vmem:[#allocation9 + $0xf8] sm:$0xff]
    %v668 = vld [vmem:[#allocation2] sm:$0xff]
    %v669 = vld [vmem:[#allocation2 + $0x8] sm:$0xff]
    %v670 = vld [vmem:[#allocation2 + $0x10] sm:$0xff]
    %v671 = vld [vmem:[#allocation2 + $0x18] sm:$0xff]
    %v672 = vld [vmem:[#allocation2 + $0x20] sm:$0xff]
    %v673 = vld [vmem:[#allocation2 + $0x28] sm:$0xff]
    %v674 = vld [vmem:[#allocation2 + $0x30] sm:$0xff]
    %v675 = vld [vmem:[#allocation2 + $0x38] sm:$0xff]
    %v676 = vld [vmem:[#allocation2 + $0x40] sm:$0xff]
    %v677 = vld [vmem:[#allocation2 + $0x48] sm:$0xff]
    %v678 = vld [vmem:[#allocation2 + $0x50] sm:$0xff]
    %v679 = vld [vmem:[#allocation2 + $0x58] sm:$0xff]
    %v680 = vld [vmem:[#allocation2 + $0x60] sm:$0xff]
    %v681 = vld [vmem:[#allocation2 + $0x68] sm:$0xff]
    %v682 = vld [vmem:[#allocation2 + $0x70] sm:$0xff]
    %v683 = vld [vmem:[#allocation2 + $0x78] sm:$0xff]
    %684 = vmatprep.subr.mxu0 0.0
    %685 = vmatpush1.msra.mxu0 %v651
    %686 = vmatprep.subr.mxu0 0.0
    %687 = vmatpush1.msra.mxu0 %v650
    %688 = vmatprep.subr.mxu0 0.0
    %689 = vmatpush1.msra.mxu0 %v649
    %690 = vmatprep.subr.mxu0 0.0
    %691 = vmatpush1.msra.mxu0 %v648
    %692 = vmatprep.subr.mxu0 0.0
    %693 = vmatpush1.msra.mxu0 %v647
    %694 = vmatprep.subr.mxu0 0.0
    %695 = vmatpush1.msra.mxu0 %v646
    %696 = vmatprep.subr.mxu0 0.0
    %697 = vmatpush1.msra.mxu0 %v645
    %698 = vmatprep.subr.mxu0 0.0
    %699 = vmatpush1.msra.mxu0 %v644
    %700 = vmatprep.subr.mxu0 0.0
    %701 = vmatpush1.msra.mxu0 %v643
    %702 = vmatprep.subr.mxu0 0.0
    %703 = vmatpush1.msra.mxu0 %v642
    %704 = vmatprep.subr.mxu0 0.0
    %705 = vmatpush1.msra.mxu0 %v641
    %706 = vmatprep.subr.mxu0 0.0
    %707 = vmatpush1.msra.mxu0 %v640
    %708 = vmatprep.subr.mxu0 0.0
    %709 = vmatpush1.msra.mxu0 %v639
    %710 = vmatprep.subr.mxu0 0.0
    %711 = vmatpush1.msra.mxu0 %v638
    %712 = vmatprep.subr.mxu0 0.0
    %713 = vmatpush1.msra.mxu0 %v637
    %714 = vmatprep.subr.mxu0 0.0
    %715 = vmatpush1.msra.mxu0 %v636
    %716 = vmatprep.subr.mxu0 0.0
    %717 = vmatpush2.msra.mxu0 %v667
    %718 = vmatprep.subr.mxu0 0.0
    %719 = vmatpush2.msra.mxu0 %v666
    %720 = vmatprep.subr.mxu0 0.0
    %721 = vmatpush2.msra.mxu0 %v665
    %722 = vmatprep.subr.mxu0 0.0
    %723 = vmatpush2.msra.mxu0 %v664
    %724 = vmatprep.subr.mxu0 0.0
    %725 = vmatpush2.msra.mxu0 %v663
    %726 = vmatprep.subr.mxu0 0.0
    %727 = vmatpush2.msra.mxu0 %v662
    %728 = vmatprep.subr.mxu0 0.0
    %729 = vmatpush2.msra.mxu0 %v661
    %730 = vmatprep.subr.mxu0 0.0
    %731 = vmatpush2.msra.mxu0 %v660
    %732 = vmatprep.subr.mxu0 0.0
    %733 = vmatpush2.msra.mxu0 %v659
    %734 = vmatprep.subr.mxu0 0.0
    %735 = vmatpush2.msra.mxu0 %v658
    %736 = vmatprep.subr.mxu0 0.0
    %737 = vmatpush2.msra.mxu0 %v657
    %738 = vmatprep.subr.mxu0 0.0
    %739 = vmatpush2.msra.mxu0 %v656
    %740 = vmatprep.subr.mxu0 0.0
    %741 = vmatpush2.msra.mxu0 %v655
    %742 = vmatprep.subr.mxu0 0.0
    %743 = vmatpush2.msra.mxu0 %v654
    %744 = vmatprep.subr.mxu0 0.0
    %745 = vmatpush2.msra.mxu0 %v653
    %746 = vmatprep.subr.mxu0 0.0
    %747 = vmatpush2.msra.mxu0 %v652
    %748 = vmatprep.mubr.f32.mxu0 %v605
    %749 = vmatmul.mubr.f32.gmra.mxu0 %v604
    %v750 = vpop.f32.mrf.mxu0
    %v751 = vadd.f32 0.0, %v750
    %v752 = vpop.f32.mrf.mxu0
    %753 = vmatprep.mubr.f32.mxu0 %v607
    %754 = vmatmul.mubr.f32.gmra.mxu0 %v606
    %v755 = vpop.f32.mrf.mxu0
    %v756 = vadd.f32 0.0, %v755
    %v757 = vpop.f32.mrf.mxu0
    %758 = vmatprep.mubr.f32.mxu0 %v609
    %759 = vmatmul.mubr.f32.gmra.mxu0 %v608
    %v760 = vpop.f32.mrf.mxu0
    %v761 = vadd.f32 0.0, %v760
    %v762 = vpop.f32.mrf.mxu0
    %763 = vmatprep.mubr.f32.mxu0 %v611
    %764 = vmatmul.mubr.f32.gmra.mxu0 %v610
    %v765 = vpop.f32.mrf.mxu0
    %v766 = vadd.f32 0.0, %v765
    %v767 = vpop.f32.mrf.mxu0
    %768 = vmatprep.mubr.f32.mxu0 %v613
    %769 = vmatmul.mubr.f32.gmra.mxu0 %v612
    %v770 = vpop.f32.mrf.mxu0
    %v771 = vadd.f32 0.0, %v770
    %v772 = vpop.f32.mrf.mxu0
    %773 = vmatprep.mubr.f32.mxu0 %v615
    %774 = vmatmul.mubr.f32.gmra.mxu0 %v614
    %v775 = vpop.f32.mrf.mxu0
    %v776 = vadd.f32 0.0, %v775
    %v777 = vpop.f32.mrf.mxu0
    %778 = vmatprep.mubr.f32.mxu0 %v617
    %779 = vmatmul.mubr.f32.gmra.mxu0 %v616
    %v780 = vpop.f32.mrf.mxu0
    %v781 = vadd.f32 0.0, %v780
    %v782 = vpop.f32.mrf.mxu0
    %783 = vmatprep.mubr.f32.mxu0 %v619
    %784 = vmatmul.mubr.f32.gmra.mxu0 %v618
    %v785 = vpop.f32.mrf.mxu0
    %v786 = vadd.f32 0.0, %v785
    %v787 = vpop.f32.mrf.mxu0
    %788 = vmatprep.mubr.f32.mxu0 %v621
    %789 = vmatmul.mubr.f32.gmra.mxu0 %v620
    %v790 = vpop.f32.mrf.mxu0
    %v791 = vadd.f32 0.0, %v790
    %v792 = vpop.f32.mrf.mxu0
    %793 = vmatprep.mubr.f32.mxu0 %v623
    %794 = vmatmul.mubr.f32.gmra.mxu0 %v622
    %v795 = vpop.f32.mrf.mxu0
    %v796 = vadd.f32 0.0, %v795
    %v797 = vpop.f32.mrf.mxu0
    %798 = vmatprep.mubr.f32.mxu0 %v625
    %799 = vmatmul.mubr.f32.gmra.mxu0 %v624
    %v800 = vpop.f32.mrf.mxu0
    %v801 = vadd.f32 0.0, %v800
    %v802 = vpop.f32.mrf.mxu0
    %803 = vmatprep.mubr.f32.mxu0 %v627
    %804 = vmatmul.mubr.f32.gmra.mxu0 %v626
    %v805 = vpop.f32.mrf.mxu0
    %v806 = vadd.f32 0.0, %v805
    %v807 = vpop.f32.mrf.mxu0
    %808 = vmatprep.mubr.f32.mxu0 %v629
    %809 = vmatmul.mubr.f32.gmra.mxu0 %v628
    %v810 = vpop.f32.mrf.mxu0
    %v811 = vadd.f32 0.0, %v810
    %v812 = vpop.f32.mrf.mxu0
    %813 = vmatprep.mubr.f32.mxu0 %v631
    %814 = vmatmul.mubr.f32.gmra.mxu0 %v630
    %v815 = vpop.f32.mrf.mxu0
    %v816 = vadd.f32 0.0, %v815
    %v817 = vpop.f32.mrf.mxu0
    %818 = vmatprep.mubr.f32.mxu0 %v633
    %819 = vmatmul.mubr.f32.gmra.mxu0 %v632
    %v820 = vpop.f32.mrf.mxu0
    %v821 = vadd.f32 0.0, %v820
    %v822 = vpop.f32.mrf.mxu0
    %823 = vmatprep.mubr.f32.mxu0 %v635
    %824 = vmatmul.mubr.f32.gmra.mxu0 %v634
    %v825 = vpop.f32.mrf.mxu0
    %v826 = vadd.f32 0.0, %v825
    %v827 = vpop.f32.mrf.mxu0
    %828 = vdwg.mxu0
    %v829 = vadd.f32 %v668, %v751
    %v830 = vadd.f32 %v669, %v756
    %v831 = vadd.f32 %v670, %v761
    %v832 = vadd.f32 %v671, %v766
    %v833 = vadd.f32 %v672, %v771
    %v834 = vadd.f32 %v673, %v776
    %v835 = vadd.f32 %v674, %v781
    %v836 = vadd.f32 %v675, %v786
    %v837 = vadd.f32 %v676, %v791
    %v838 = vadd.f32 %v677, %v796
    %v839 = vadd.f32 %v678, %v801
    %v840 = vadd.f32 %v679, %v806
    %v841 = vadd.f32 %v680, %v811
    %v842 = vadd.f32 %v681, %v816
    %v843 = vadd.f32 %v682, %v821
    %v844 = vadd.f32 %v683, %v826
    %845 = vst [vmem:[#allocation2] sm:$0xff] %v829
    %846 = vst [vmem:[#allocation2 + $0x8] sm:$0xff] %v830
    %847 = vst [vmem:[#allocation2 + $0x10] sm:$0xff] %v831
    %848 = vst [vmem:[#allocation2 + $0x18] sm:$0xff] %v832
    %849 = vst [vmem:[#allocation2 + $0x20] sm:$0xff] %v833
    %850 = vst [vmem:[#allocation2 + $0x28] sm:$0xff] %v834
    %851 = vst [vmem:[#allocation2 + $0x30] sm:$0xff] %v835
    %852 = vst [vmem:[#allocation2 + $0x38] sm:$0xff] %v836
    %853 = vst [vmem:[#allocation2 + $0x40] sm:$0xff] %v837
    %854 = vst [vmem:[#allocation2 + $0x48] sm:$0xff] %v838
    %855 = vst [vmem:[#allocation2 + $0x50] sm:$0xff] %v839
    %856 = vst [vmem:[#allocation2 + $0x58] sm:$0xff] %v840
    %857 = vst [vmem:[#allocation2 + $0x60] sm:$0xff] %v841
    %858 = vst [vmem:[#allocation2 + $0x68] sm:$0xff] %v842
    %859 = vst [vmem:[#allocation2 + $0x70] sm:$0xff] %v843
    %860 = vst [vmem:[#allocation2 + $0x78] sm:$0xff] %v844
    // Predicated region
    $region46: #{tpu_custom_call.1} parent=1 // pred_check
      %p861 = pneg %p68
    $region47: #{tpu_custom_call.1} parent=1 // pred_check_branch
      %863 = sbr.rel (%p861) target = $region49
    $region48: #{tpu_custom_call.1} parent=1 // pred_region
      %v864 = vld [vmem:[#allocation2] sm:$0xff]
      %v865 = vld [vmem:[#allocation2 + $0x8] sm:$0xff]
      %v866 = vld [vmem:[#allocation2 + $0x10] sm:$0xff]
      %v867 = vld [vmem:[#allocation2 + $0x18] sm:$0xff]
      %v868 = vld [vmem:[#allocation2 + $0x20] sm:$0xff]
      %v869 = vld [vmem:[#allocation2 + $0x28] sm:$0xff]
      %v870 = vld [vmem:[#allocation2 + $0x30] sm:$0xff]
      %v871 = vld [vmem:[#allocation2 + $0x38] sm:$0xff]
      %v872 = vld [vmem:[#allocation2 + $0x40] sm:$0xff]
      %v873 = vld [vmem:[#allocation2 + $0x48] sm:$0xff]
      %v874 = vld [vmem:[#allocation2 + $0x50] sm:$0xff]
      %v875 = vld [vmem:[#allocation2 + $0x58] sm:$0xff]
      %v876 = vld [vmem:[#allocation2 + $0x60] sm:$0xff]
      %v877 = vld [vmem:[#allocation2 + $0x68] sm:$0xff]
      %v878 = vld [vmem:[#allocation2 + $0x70] sm:$0xff]
      %v879 = vld [vmem:[#allocation2 + $0x78] sm:$0xff]
      %v880 = vld [vmem:[%s6] sm:$0x1]
      %v882 = vlaneseq
      %v883 = vshrl.u32 %v882, 7
      %v884 = vsub.s32 0, %v883
      %v885 = vrot.slane %v880, %v884
      %v887 = vadd.f32 %v864, %v885
      %v888 = vadd.f32 %v865, %v885
      %v889 = vadd.f32 %v866, %v885
      %v890 = vadd.f32 %v867, %v885
      %v891 = vadd.f32 %v868, %v885
      %v892 = vadd.f32 %v869, %v885
      %v893 = vadd.f32 %v870, %v885
      %v894 = vadd.f32 %v871, %v885
      %v895 = vadd.f32 %v872, %v885
      %v896 = vadd.f32 %v873, %v885
      %v897 = vadd.f32 %v874, %v885
      %v898 = vadd.f32 %v875, %v885
      %v899 = vadd.f32 %v876, %v885
      %v900 = vadd.f32 %v877, %v885
      %v901 = vadd.f32 %v878, %v885
      %v902 = vadd.f32 %v879, %v885
      %v903 = vld [vmem:[#allocation4] sm:$0xff]
      %v904 = vld [vmem:[#allocation4 + $0x8] sm:$0xff]
      %v905 = vld [vmem:[#allocation4 + $0x10] sm:$0xff]
      %v906 = vld [vmem:[#allocation4 + $0x18] sm:$0xff]
      %v907 = vld [vmem:[#allocation4 + $0x20] sm:$0xff]
      %v908 = vld [vmem:[#allocation4 + $0x28] sm:$0xff]
      %v909 = vld [vmem:[#allocation4 + $0x30] sm:$0xff]
      %v910 = vld [vmem:[#allocation4 + $0x38] sm:$0xff]
      %v911 = vld [vmem:[#allocation4 + $0x40] sm:$0xff]
      %v912 = vld [vmem:[#allocation4 + $0x48] sm:$0xff]
      %v913 = vld [vmem:[#allocation4 + $0x50] sm:$0xff]
      %v914 = vld [vmem:[#allocation4 + $0x58] sm:$0xff]
      %v915 = vld [vmem:[#allocation4 + $0x60] sm:$0xff]
      %v916 = vld [vmem:[#allocation4 + $0x68] sm:$0xff]
      %v917 = vld [vmem:[#allocation4 + $0x70] sm:$0xff]
      %v918 = vld [vmem:[#allocation4 + $0x78] sm:$0xff]
      %v919 = vadd.f32 %v887, %v903
      %v920 = vadd.f32 %v888, %v904
      %v921 = vadd.f32 %v889, %v905
      %v922 = vadd.f32 %v890, %v906
      %v923 = vadd.f32 %v891, %v907
      %v924 = vadd.f32 %v892, %v908
      %v925 = vadd.f32 %v893, %v909
      %v926 = vadd.f32 %v894, %v910
      %v927 = vadd.f32 %v895, %v911
      %v928 = vadd.f32 %v896, %v912
      %v929 = vadd.f32 %v897, %v913
      %v930 = vadd.f32 %v898, %v914
      %v931 = vadd.f32 %v899, %v915
      %v932 = vadd.f32 %v900, %v916
      %v933 = vadd.f32 %v901, %v917
      %v934 = vadd.f32 %v902, %v918
      %935 = vst [vmem:[#allocation10] sm:$0xff] %v919
      %936 = vst [vmem:[#allocation10 + $0x8] sm:$0xff] %v920
      %937 = vst [vmem:[#allocation10 + $0x10] sm:$0xff] %v921
      %938 = vst [vmem:[#allocation10 + $0x18] sm:$0xff] %v922
      %939 = vst [vmem:[#allocation10 + $0x20] sm:$0xff] %v923
      %940 = vst [vmem:[#allocation10 + $0x28] sm:$0xff] %v924
      %941 = vst [vmem:[#allocation10 + $0x30] sm:$0xff] %v925
      %942 = vst [vmem:[#allocation10 + $0x38] sm:$0xff] %v926
      %943 = vst [vmem:[#allocation10 + $0x40] sm:$0xff] %v927
      %944 = vst [vmem:[#allocation10 + $0x48] sm:$0xff] %v928
      %945 = vst [vmem:[#allocation10 + $0x50] sm:$0xff] %v929
      %946 = vst [vmem:[#allocation10 + $0x58] sm:$0xff] %v930
      %947 = vst [vmem:[#allocation10 + $0x60] sm:$0xff] %v931
      %948 = vst [vmem:[#allocation10 + $0x68] sm:$0xff] %v932
      %949 = vst [vmem:[#allocation10 + $0x70] sm:$0xff] %v933
      %950 = vst [vmem:[#allocation10 + $0x78] sm:$0xff] %v934
    $region49: #{tpu_custom_call.1} parent=1 // pred_fallthru
      _
    // Predicated region
    $region50: #{tpu_custom_call.1} parent=1 // pred_check
      _
    $region51: #{tpu_custom_call.1} parent=1 // pred_check_branch
      %952 = sbr.rel (0) target = $region53
    $region52: #{tpu_custom_call.1} parent=1 // pred_region
      %s954 = ssub.s32 2048, 2048
      %955 = vsyncadd [#allocation6], %s954
      %s956 = sshll.u32 [#allocation10], 4
      %s957 = int_to_ptr.vmem [resolvable:$true] %s956
      %962 = dma.vmem_to_hbm [thread:$0]  %s957, 2048, %s7, [#allocation6], 128, 128, 8
    $region53: #{tpu_custom_call.1} parent=1 // pred_fallthru
      _
    // Predicated region
    $region54: #{tpu_custom_call.1} parent=1 // pred_check
      _
    $region55: #{tpu_custom_call.1} parent=1 // pred_check_branch
      %964 = sbr.rel (0) target = $region57
    $region56: #{tpu_custom_call.1} parent=1 // pred_region
      %965 = dma.done [#allocation6], 2048
    $region57: #{tpu_custom_call.1} parent=1 // pred_fallthru
      _
    %966 = vsyncpa [#allocation5], 1
    %967 = vsyncpa [#allocation8], 1
    %968 = vsyncpa [#allocation6], 1

</llo_original>
